<compile_context>
chip_gen: v5e
topology: v5e:2x2
jax: 0.10.0
libtpu: 0.0.40
codegen_flags: <defaults>
</compile_context>

<pallas_src>
import jax
import jax.numpy as jnp
from jax.experimental import pallas as pl
from jax.experimental.pallas import tpu as pltpu

IN_DIM, H1, H2, OUT_DIM = 20, 128, 32, 2
BN_EPS = 1e-5


def _round_up(n, m):
    return ((n + m - 1) // m) * m


def _mlp_kernel(x_ref, w1_ref, b1_ref, w2_ref, b2_ref, dw3_ref, db3_ref, o_ref):
    # x tile arrives f32; cast to bf16 in-kernel (hidden under MXU work).
    x = x_ref[...].astype(jnp.bfloat16)                                  # (TB, 20)

    h1 = jnp.dot(x, w1_ref[...], preferred_element_type=jnp.float32) + b1_ref[...]
    h1 = jnp.maximum(h1, 0.0).astype(jnp.bfloat16)                       # fused ReLU + downcast

    h2 = jnp.dot(h1, w2_ref[...], preferred_element_type=jnp.float32) + b2_ref[...]
    h2 = jnp.maximum(h2, 0.0)                                            # (TB, 32) f32

    # fc3 + 2-class softmax == sigmoid of the logit difference.
    # 32-lane VPU multiply + XLU lane-reduce; exact row sums, MXU slot freed.
    d = jnp.sum(h2 * dw3_ref[...], axis=-1, keepdims=True) + db3_ref[...]  # (TB, 1)
    p1 = 1.0 / (1.0 + jnp.exp(-d))
    p0 = 1.0 - p1

    col = jax.lax.broadcasted_iota(jnp.int32, (o_ref.shape[0], OUT_DIM), 1)
    o_ref[...] = jnp.where(col == 1, p1, p0).astype(o_ref.dtype)


def dense_classification_net(x, params, *, block_b=8192):
    """params = (w1, b1, w2f, b2f, dw3, db3) with BN folded (see fold_params)."""
    w1, b1, w2, b2, dw3, db3 = params
    B = x.shape[0]
    # Large tile to amortize per-step pipeline overhead, but keep >= 2 grid steps
    # (when B allows) so both TensorCores get work on v7x.  Multiple of 8 for
    # sublane alignment.  ~1-2 KB/row of live activations -> TB=8192 stays well
    # inside the 32 MiB scoped-VMEM limit on every generation (incl. v7x 64 MiB/TC).
    TB = min(block_b, _round_up(pl.cdiv(B, 2), 8))
    TB = min(TB, _round_up(B, 8))
    grid = (pl.cdiv(B, TB),)

    return pl.pallas_call(
        _mlp_kernel,
        out_shape=jax.ShapeDtypeStruct((B, OUT_DIM), jnp.float32),
        grid=grid,
        in_specs=[
            pl.BlockSpec((TB, IN_DIM), lambda i: (i, 0)),     # x: batch-tiled (f32 in HBM)
            pl.BlockSpec((IN_DIM, H1), lambda i: (0, 0)),     # weights/biases: VMEM-resident
            pl.BlockSpec((1, H1), lambda i: (0, 0)),
            pl.BlockSpec((H1, H2), lambda i: (0, 0)),
            pl.BlockSpec((1, H2), lambda i: (0, 0)),
            pl.BlockSpec((1, H2), lambda i: (0, 0)),          # dw3 (f32, VPU operand)
            pl.BlockSpec((1, 1), lambda i: (0, 0)),           # db3
        ],
        out_specs=pl.BlockSpec((TB, OUT_DIM), lambda i: (i, 0)),
        compiler_params=pltpu.CompilerParams(
            dimension_semantics=("parallel",),    # shards batch across TCs on v7x
            vmem_limit_bytes=32 * 1024 * 1024,    # safe on v5e/v6e/v7x
        ),
    )(x, w1, b1, w2, b2, dw3, db3)


def init_params(key):
    """Deterministic init mirroring the PyTorch module's __init__ (raw, unfolded)."""
    def xavier_uniform(k, fan_in, fan_out):
        bound = jnp.sqrt(6.0 / (fan_in + fan_out))
        # stored as (in, out) so the kernel does x @ W  (== PyTorch x @ W.T)
        return jax.random.uniform(k, (fan_in, fan_out), jnp.float32, -bound, bound)

    def linear_bias(k, fan_in, fan_out):
        bound = 1.0 / jnp.sqrt(jnp.float32(fan_in))
        return jax.random.uniform(k, (1, fan_out), jnp.float32, -bound, bound)

    ks = jax.random.split(key, 6)
    w1 = xavier_uniform(ks[0], IN_DIM, H1)
    b1 = linear_bias(ks[1], IN_DIM, H1)
    w2 = xavier_uniform(ks[2], H1, H2)
    b2 = linear_bias(ks[3], H1, H2)
    w3 = xavier_uniform(ks[4], H2, OUT_DIM)
    b3 = linear_bias(ks[5], H2, OUT_DIM)

    def bn_init(num_feat):
        gamma = jnp.ones((1, num_feat), jnp.float32)
        beta = jnp.zeros((1, num_feat), jnp.float32)
        running_mean = jnp.zeros((1, num_feat), jnp.float32)
        running_var = jnp.ones((1, num_feat), jnp.float32)
        return gamma, beta, running_mean, running_var

    g1, be1, m1, v1 = bn_init(H1)
    g2, be2, m2, v2 = bn_init(H2)
    return (w1, b1, w2, b2, w3, b3, g1, be1, m1, v1, g2, be2, m2, v2)


def fold_params(raw):
    """Fold eval-mode BatchNorm into the following Linear; reduce fc3 to a logit diff."""
    (w1, b1, w2, b2, w3, b3, g1, be1, m1, v1, g2, be2, m2, v2) = raw
    s1 = g1 / jnp.sqrt(v1 + BN_EPS)          # (1, H1)
    sh1 = be1 - m1 * s1
    s2 = g2 / jnp.sqrt(v2 + BN_EPS)          # (1, H2)
    sh2 = be2 - m2 * s2
    # relu(fc1(x)) * s1 + sh1, then @ W2 + b2  ==  relu(fc1(x)) @ (diag(s1) W2) + (sh1 W2 + b2)
    w2f = s1.reshape(H1, 1) * w2
    b2f = sh1 @ w2 + b2
    w3f = s2.reshape(H2, 1) * w3
    b3f = sh2 @ w3 + b3
    # 2-class softmax == [1 - sigmoid(d), sigmoid(d)] with d the logit difference.
    dw3 = (w3f[:, 1] - w3f[:, 0]).reshape(1, H2).astype(jnp.float32)
    db3 = (b3f[0, 1] - b3f[0, 0]).reshape(1, 1).astype(jnp.float32)
    bf = jnp.bfloat16
    return (w1.astype(bf), b1.astype(jnp.float32),
            w2f.astype(bf), b2f.astype(jnp.float32),
            dw3, db3)


def reference_forward_folded(x, folded):
    """Same math as the kernel (bf16 matmul inputs, f32 accumulation, sigmoid form)."""
    w1, b1, w2, b2, dw3, db3 = folded
    xb = x.astype(jnp.bfloat16)
    h1 = jnp.maximum(jnp.dot(xb, w1, preferred_element_type=jnp.float32) + b1,
                     0.0).astype(jnp.bfloat16)
    h2 = jnp.maximum(jnp.dot(h1, w2, preferred_element_type=jnp.float32) + b2, 0.0)
    d = jnp.sum(h2 * dw3, axis=-1, keepdims=True) + db3
    p1 = 1.0 / (1.0 + jnp.exp(-d))
    return jnp.concatenate([1.0 - p1, p1], axis=-1)


def reference_forward_f32(x, raw):
    """Full-precision, unfolded reference mirroring the PyTorch eval forward."""
    (w1, b1, w2, b2, w3, b3, g1, be1, m1, v1, g2, be2, m2, v2) = raw
    h1 = jnp.maximum(x @ w1 + b1, 0.0)
    h1 = (h1 - m1) / jnp.sqrt(v1 + BN_EPS) * g1 + be1
    h2 = jnp.maximum(h1 @ w2 + b2, 0.0)
    h2 = (h2 - m2) / jnp.sqrt(v2 + BN_EPS) * g2 + be2
    logits = h2 @ w3 + b3
    return jax.nn.softmax(logits, axis=-1)


if __name__ == "__main__":
    key = jax.random.PRNGKey(0)
    k_param, k_x = jax.random.split(key)
    raw = init_params(k_param)
    folded = fold_params(raw)

    # Small-shape run (single grid step).
    B = 8
    x = jax.random.normal(k_x, (B, IN_DIM), jnp.float32)
    out = jax.block_until_ready(dense_classification_net(x, folded))
    assert out.shape == (B, OUT_DIM)

    ref_bf16 = reference_forward_folded(x, folded)
    ref_f32 = reference_forward_f32(x, raw)
    assert jnp.allclose(out, ref_bf16, atol=2e-3), "mismatch vs bf16 JAX reference"
    assert jnp.allclose(out, ref_f32, atol=2e-2), "mismatch vs f32 PyTorch-mirror reference"
    assert jnp.allclose(jnp.sum(out, axis=1), 1.0, atol=1e-5), "softmax rows must sum to 1"

    # Exercise the batch-tiled grid path (several grid steps, still small).
    B2 = 64
    x2 = jax.random.normal(jax.random.PRNGKey(1), (B2, IN_DIM), jnp.float32)
    out2 = jax.block_until_ready(dense_classification_net(x2, folded, block_b=16))
    ref2 = reference_forward_folded(x2, folded)
    assert out2.shape == (B2, OUT_DIM)
    assert jnp.allclose(out2, ref2, atol=2e-3), "mismatch vs reference on tiled grid"
    assert jnp.allclose(jnp.sum(out2, axis=1), 1.0, atol=1e-5), "softmax rows must sum to 1"

    print("KERNEL_OK")
</pallas_src>

<mosaic_0001>
module attributes {stable_mosaic.version = 11 : i64} {
  func.func @_mlp_kernel(%arg0: i32, %arg1: memref<8x20xf32, #tpu.memory_space<vmem>>, %arg2: memref<20x128xbf16, #tpu.memory_space<vmem>>, %arg3: memref<1x128xf32, #tpu.memory_space<vmem>>, %arg4: memref<128x32xbf16, #tpu.memory_space<vmem>>, %arg5: memref<1x32xf32, #tpu.memory_space<vmem>>, %arg6: memref<1x32xf32, #tpu.memory_space<vmem>>, %arg7: memref<1x1xf32, #tpu.memory_space<vmem>>, %arg8: memref<8x2xf32, #tpu.memory_space<vmem>>) attributes {dimension_semantics = [#tpu.dimension_semantics<parallel>], iteration_bounds = array<i64: 1>, scalar_prefetch = 0 : i64, scratch_operands = 0 : i64, tpu.core_type = #tpu.core_type<tc>, window_params = [{transform_indices = @transform_0, window_bounds = array<i64: 8, 20>}, {pipeline_mode = #tpu.pipeline_mode<synchronous>, transform_indices = @transform_1, window_bounds = array<i64: 20, 128>}, {pipeline_mode = #tpu.pipeline_mode<synchronous>, transform_indices = @transform_2, window_bounds = array<i64: 1, 128>}, {pipeline_mode = #tpu.pipeline_mode<synchronous>, transform_indices = @transform_3, window_bounds = array<i64: 128, 32>}, {pipeline_mode = #tpu.pipeline_mode<synchronous>, transform_indices = @transform_4, window_bounds = array<i64: 1, 32>}, {pipeline_mode = #tpu.pipeline_mode<synchronous>, transform_indices = @transform_5, window_bounds = array<i64: 1, 32>}, {pipeline_mode = #tpu.pipeline_mode<synchronous>, transform_indices = @transform_6, window_bounds = array<i64: 1, 1>}, {transform_indices = @transform_7, window_bounds = array<i64: 8, 2>}]} {
    %c0 = arith.constant 0 : index
    %c0_0 = arith.constant 0 : index
    %0 = vector.load %arg1[%c0, %c0_0] : memref<8x20xf32, #tpu.memory_space<vmem>>, vector<8x20xf32>
    %1 = arith.truncf %0 : vector<8x20xf32> to vector<8x20xbf16>
    %c0_1 = arith.constant 0 : index
    %c0_2 = arith.constant 0 : index
    %2 = vector.load %arg2[%c0_1, %c0_2] : memref<20x128xbf16, #tpu.memory_space<vmem>>, vector<20x128xbf16>
    %cst = arith.constant dense<0.000000e+00> : vector<8x128xf32>
    %3 = tpu.matmul %1, %2, %cst {dimension_numbers = #tpu.dot_dimension_numbers<[1], [0], [0], [1], [0, 0, 1, 1], [], []>} : vector<8x20xbf16>, vector<20x128xbf16>, vector<8x128xf32> -> vector<8x128xf32>
    %c0_3 = arith.constant 0 : index
    %c0_4 = arith.constant 0 : index
    %4 = vector.load %arg3[%c0_3, %c0_4] : memref<1x128xf32, #tpu.memory_space<vmem>>, vector<1x128xf32>
    %5 = vector.broadcast %4 : vector<1x128xf32> to vector<8x128xf32>
    %6 = arith.addf %3, %5 : vector<8x128xf32>
    %cst_5 = arith.constant 0.000000e+00 : f32
    %7 = vector.broadcast %cst_5 : f32 to vector<8x128xf32>
    %8 = arith.maximumf %6, %7 : vector<8x128xf32>
    %9 = arith.truncf %8 : vector<8x128xf32> to vector<8x128xbf16>
    %c0_6 = arith.constant 0 : index
    %c0_7 = arith.constant 0 : index
    %10 = vector.load %arg4[%c0_6, %c0_7] : memref<128x32xbf16, #tpu.memory_space<vmem>>, vector<128x32xbf16>
    %cst_8 = arith.constant dense<0.000000e+00> : vector<8x32xf32>
    %11 = tpu.matmul %9, %10, %cst_8 {dimension_numbers = #tpu.dot_dimension_numbers<[1], [0], [0], [1], [0, 0, 1, 1], [], []>} : vector<8x128xbf16>, vector<128x32xbf16>, vector<8x32xf32> -> vector<8x32xf32>
    %c0_9 = arith.constant 0 : index
    %c0_10 = arith.constant 0 : index
    %12 = vector.load %arg5[%c0_9, %c0_10] : memref<1x32xf32, #tpu.memory_space<vmem>>, vector<1x32xf32>
    %13 = vector.broadcast %12 : vector<1x32xf32> to vector<8x32xf32>
    %14 = arith.addf %11, %13 : vector<8x32xf32>
    %cst_11 = arith.constant 0.000000e+00 : f32
    %15 = vector.broadcast %cst_11 : f32 to vector<8x32xf32>
    %16 = arith.maximumf %14, %15 : vector<8x32xf32>
    %c0_12 = arith.constant 0 : index
    %c0_13 = arith.constant 0 : index
    %17 = vector.load %arg6[%c0_12, %c0_13] : memref<1x32xf32, #tpu.memory_space<vmem>>, vector<1x32xf32>
    %18 = vector.broadcast %17 : vector<1x32xf32> to vector<8x32xf32>
    %19 = arith.mulf %16, %18 : vector<8x32xf32>
    %cst_14 = arith.constant dense<0.000000e+00> : vector<8xf32>
    %20 = vector.multi_reduction <add>, %19, %cst_14 [1] : vector<8x32xf32> to vector<8xf32>
    %21 = vector.shape_cast %20 : vector<8xf32> to vector<8x1xf32>
    %c0_15 = arith.constant 0 : index
    %c0_16 = arith.constant 0 : index
    %22 = vector.load %arg7[%c0_15, %c0_16] : memref<1x1xf32, #tpu.memory_space<vmem>>, vector<1x1xf32>
    %23 = vector.broadcast %22 : vector<1x1xf32> to vector<8x1xf32>
    %24 = arith.addf %21, %23 : vector<8x1xf32>
    %cst_17 = arith.constant 0.000000e+00 : f32
    %25 = vector.broadcast %cst_17 : f32 to vector<8x1xf32>
    %26 = arith.subf %25, %24 : vector<8x1xf32>
    %27 = math.exp %26 : vector<8x1xf32>
    %cst_18 = arith.constant 1.000000e+00 : f32
    %28 = vector.broadcast %cst_18 : f32 to vector<8x1xf32>
    %29 = arith.addf %28, %27 : vector<8x1xf32>
    %cst_19 = arith.constant 1.000000e+00 : f32
    %30 = vector.broadcast %cst_19 : f32 to vector<8x1xf32>
    %31 = arith.divf %30, %29 : vector<8x1xf32>
    %cst_20 = arith.constant 1.000000e+00 : f32
    %32 = vector.broadcast %cst_20 : f32 to vector<8x1xf32>
    %33 = arith.subf %32, %31 : vector<8x1xf32>
    %34 = tpu.iota {dimensions = array<i32: 1>} : vector<8x2xi32>
    %c1_i32 = arith.constant 1 : i32
    %35 = vector.broadcast %c1_i32 : i32 to vector<8x2xi32>
    %36 = arith.cmpi eq, %34, %35 : vector<8x2xi32>
    %37 = vector.shape_cast %31 : vector<8x1xf32> to vector<8x1xf32>
    %38 = vector.broadcast %37 : vector<8x1xf32> to vector<8x2xf32>
    %39 = vector.shape_cast %33 : vector<8x1xf32> to vector<8x1xf32>
    %40 = vector.broadcast %39 : vector<8x1xf32> to vector<8x2xf32>
    %41 = arith.select %36, %38, %40 : vector<8x2xi1>, vector<8x2xf32>
    %c0_21 = arith.constant 0 : index
    %c0_22 = arith.constant 0 : index
    %42 = vector.load %arg8[%c0_21, %c0_22] : memref<8x2xf32, #tpu.memory_space<vmem>>, vector<8x2xf32>
    tpu.vector_store %arg8[%c0_21, %c0_22], %41 {strides = array<i32>} : memref<8x2xf32, #tpu.memory_space<vmem>>, vector<8x2xf32>,
    return
  }
  func.func @transform_0(%arg0: i32) -> (i32, i32) {
    %c0_i32 = arith.constant 0 : i32
    %c0_i32_0 = arith.constant 0 : i32
    return %arg0, %c0_i32 : i32, i32
  }
  func.func @transform_1(%arg0: i32) -> (i32, i32) {
    %c0_i32 = arith.constant 0 : i32
    %c0_i32_0 = arith.constant 0 : i32
    %c0_i32_1 = arith.constant 0 : i32
    return %c0_i32, %c0_i32_0 : i32, i32
  }
  func.func @transform_2(%arg0: i32) -> (i32, i32) {
    %c0_i32 = arith.constant 0 : i32
    %c0_i32_0 = arith.constant 0 : i32
    %c0_i32_1 = arith.constant 0 : i32
    return %c0_i32, %c0_i32_0 : i32, i32
  }
  func.func @transform_3(%arg0: i32) -> (i32, i32) {
    %c0_i32 = arith.constant 0 : i32
    %c0_i32_0 = arith.constant 0 : i32
    %c0_i32_1 = arith.constant 0 : i32
    return %c0_i32, %c0_i32_0 : i32, i32
  }
  func.func @transform_4(%arg0: i32) -> (i32, i32) {
    %c0_i32 = arith.constant 0 : i32
    %c0_i32_0 = arith.constant 0 : i32
    %c0_i32_1 = arith.constant 0 : i32
    return %c0_i32, %c0_i32_0 : i32, i32
  }
  func.func @transform_5(%arg0: i32) -> (i32, i32) {
    %c0_i32 = arith.constant 0 : i32
    %c0_i32_0 = arith.constant 0 : i32
    %c0_i32_1 = arith.constant 0 : i32
    return %c0_i32, %c0_i32_0 : i32, i32
  }
  func.func @transform_6(%arg0: i32) -> (i32, i32) {
    %c0_i32 = arith.constant 0 : i32
    %c0_i32_0 = arith.constant 0 : i32
    %c0_i32_1 = arith.constant 0 : i32
    return %c0_i32, %c0_i32_0 : i32, i32
  }
  func.func @transform_7(%arg0: i32) -> (i32, i32) {
    %c0_i32 = arith.constant 0 : i32
    %c0_i32_0 = arith.constant 0 : i32
    return %arg0, %c0_i32 : i32, i32
  }
}

</mosaic_0001>

<llo_original>
// kernel: tpu_custom_call.1
$region0: #{tpu_custom_call.1}
  #allocation0 [shape = 'u32[]', space=smem, size = 0x4, offset = 0x4, fixed_abs, tag = 'smem constant byte address 0x4 - core index']
  #allocation1 [shape = 'u32[72,128]{1,0:T(1,128)}', space=vmem, size = 0x9000, scoped, tag = 'internal scratch']
  #allocation2 [shape = 'f32[1,1]{1,0:T(1,128)S(1)}', space=vmem, size = 0x200, scoped, tag = 'scoped memory for tpu_custom_call.1']
  %s0 = inlined_call_operand.vmem [shape: f32[8,20], index: 0, kind: input, shape index: {}]
  %s1 = inlined_call_operand.vmem [shape: bf16[20,128], index: 1, kind: input, shape index: {}]
  %s2 = inlined_call_operand.vmem [shape: f32[1,128], index: 2, kind: input, shape index: {}]
  %s3 = inlined_call_operand.vmem [shape: bf16[128,32], index: 3, kind: input, shape index: {}]
  %s4 = inlined_call_operand.vmem [shape: f32[1,32], index: 4, kind: input, shape index: {}]
  %s5 = inlined_call_operand.vmem [shape: f32[1,32], index: 5, kind: input, shape index: {}]
  %s6 = inlined_call_operand.<no memory space> [shape: f32[1,1], index: 6, kind: input, shape index: {}]
  %s7 = inlined_call_operand.vmem [shape: f32[8,2], index: 7, kind: output, shape index: {}]
  %s8 = sld [smem:[#allocation0]]
  $region38: #{tpu_custom_call.1} parent=0
    _
  %s10 = ssub.s32 1, %s8
  %s11 = scalar_select 0, %s10, %s8
  %v12 = vstv %s6
  %13 = vst [vmem:[#allocation2] sm:$0x1] %v12
  // Predicated region
  $region2: #{tpu_custom_call.1} parent=0 // pred_check
    _
  $region3: #{tpu_custom_call.1} parent=0 // pred_check_branch
    %15 = sbr.rel (0) target = $region5
  $region4: #{tpu_custom_call.1} parent=0 // pred_region
    _
  $region5: #{tpu_custom_call.1} parent=0 // pred_fallthru
    _
  // Predicated region
  $region6: #{tpu_custom_call.1} parent=0 // pred_check
    _
  $region7: #{tpu_custom_call.1} parent=0 // pred_check_branch
    %17 = sbr.rel (0) target = $region9
  $region8: #{tpu_custom_call.1} parent=0 // pred_region
    _
  $region9: #{tpu_custom_call.1} parent=0 // pred_fallthru
    _
  // Predicated region
  $region10: #{tpu_custom_call.1} parent=0 // pred_check
    _
  $region11: #{tpu_custom_call.1} parent=0 // pred_check_branch
    %19 = sbr.rel (0) target = $region13
  $region12: #{tpu_custom_call.1} parent=0 // pred_region
    _
  $region13: #{tpu_custom_call.1} parent=0 // pred_fallthru
    _
  // Predicated region
  $region14: #{tpu_custom_call.1} parent=0 // pred_check
    _
  $region15: #{tpu_custom_call.1} parent=0 // pred_check_branch
    %21 = sbr.rel (0) target = $region17
  $region16: #{tpu_custom_call.1} parent=0 // pred_region
    _
  $region17: #{tpu_custom_call.1} parent=0 // pred_fallthru
    _
  // Predicated region
  $region18: #{tpu_custom_call.1} parent=0 // pred_check
    _
  $region19: #{tpu_custom_call.1} parent=0 // pred_check_branch
    %23 = sbr.rel (0) target = $region21
  $region20: #{tpu_custom_call.1} parent=0 // pred_region
    _
  $region21: #{tpu_custom_call.1} parent=0 // pred_fallthru
    _
  // Predicated region
  $region22: #{tpu_custom_call.1} parent=0 // pred_check
    _
  $region23: #{tpu_custom_call.1} parent=0 // pred_check_branch
    %25 = sbr.rel (0) target = $region25
  $region24: #{tpu_custom_call.1} parent=0 // pred_region
    _
  $region25: #{tpu_custom_call.1} parent=0 // pred_fallthru
    _
  // Predicated region
  $region26: #{tpu_custom_call.1} parent=0 // pred_check
    _
  $region27: #{tpu_custom_call.1} parent=0 // pred_check_branch
    %27 = sbr.rel (0) target = $region29
  $region28: #{tpu_custom_call.1} parent=0 // pred_region
    _
  $region29: #{tpu_custom_call.1} parent=0 // pred_fallthru
    _
  %v29 = vld [vmem:[%s0] sm:$0xff]
  %v30 = vpack.c.bf16 %v29, %v29
  %v31 = vld [vmem:[%s1] sm:$0xf]
  %v32 = vld [vmem:[%s1 + $0x4] sm:$0xf]
  %v33 = vld [vmem:[%s1 + $0x8] sm:$0x3]
  %v34 = vld [vmem:[%s2] sm:$0x1]
  %v36 = vperm.slane %v34, 0
  %v41 = vunpack.c.l.b16 %v31
  %v42 = vunpack.c.l.b16 %v32
  %v43 = vunpack.c.l.b16 %v33
  %v44 = vpack.c.b16 %v42, %v41
  %v45 = vpack.c.b16 %v43, %v43
  %vm47 = vcmask 162816
  %v49 = vsel %vm47, %v30, 0
  %vm51 = vcmask 1041408
  %v53 = vsel %vm51, %v45, 0
  %55 = vmatpush.bf16.msra.mxu0 0
  %56 = vmatpush.bf16.msra.mxu0 0
  %57 = vmatpush.bf16.msra.mxu0 0
  %58 = vmatpush.bf16.msra.mxu0 0
  %59 = vmatpush.bf16.msra.mxu0 0
  %60 = vmatpush.bf16.msra.mxu0 0
  %61 = vmatpush.bf16.msra.mxu0 %v53
  %62 = vmatpush.bf16.msra.mxu0 %v44
  %63 = vmatmul.bf16.gmra.mxu0 %v49
  %v64 = vpop.f32.mrf.mxu0
  %v65 = vadd.f32 %v36, %v64
  %v66 = vpop.f32.mrf.mxu0
  %67 = vdwg.mxu0
  %v68 = vmax.f32 %v65, 0.0
  %v69 = vpack.c.bf16 %v68, %v68
  %v70 = vld [vmem:[%s3] sm:$0xf]
  %v71 = vld [vmem:[%s3 + $0x4] sm:$0xf]
  %v72 = vld [vmem:[%s3 + $0x8] sm:$0xf]
  %v73 = vld [vmem:[%s3 + $0xc] sm:$0xf]
  %v74 = vld [vmem:[%s3 + $0x10] sm:$0xf]
  %v75 = vld [vmem:[%s3 + $0x14] sm:$0xf]
  %v76 = vld [vmem:[%s3 + $0x18] sm:$0xf]
  %v77 = vld [vmem:[%s3 + $0x1c] sm:$0xf]
  %v78 = vld [vmem:[%s3 + $0x20] sm:$0xf]
  %v79 = vld [vmem:[%s3 + $0x24] sm:$0xf]
  %v80 = vld [vmem:[%s3 + $0x28] sm:$0xf]
  %v81 = vld [vmem:[%s3 + $0x2c] sm:$0xf]
  %v82 = vld [vmem:[%s3 + $0x30] sm:$0xf]
  %v83 = vld [vmem:[%s3 + $0x34] sm:$0xf]
  %v84 = vld [vmem:[%s3 + $0x38] sm:$0xf]
  %v85 = vld [vmem:[%s3 + $0x3c] sm:$0xf]
  %v86 = vld [vmem:[%s4] sm:$0x1]
  %v88 = vperm.slane %v86, 0
  %v106 = vunpack.c.l.b16 %v70
  %v107 = vunpack.c.l.b16 %v71
  %v108 = vunpack.c.l.b16 %v72
  %v109 = vunpack.c.l.b16 %v73
  %v110 = vunpack.c.l.b16 %v74
  %v111 = vunpack.c.l.b16 %v75
  %v112 = vunpack.c.l.b16 %v76
  %v113 = vunpack.c.l.b16 %v77
  %v114 = vunpack.c.l.b16 %v78
  %v115 = vunpack.c.l.b16 %v79
  %v116 = vunpack.c.l.b16 %v80
  %v117 = vunpack.c.l.b16 %v81
  %v118 = vunpack.c.l.b16 %v82
  %v119 = vunpack.c.l.b16 %v83
  %v120 = vunpack.c.l.b16 %v84
  %v121 = vunpack.c.l.b16 %v85
  %v122 = vpack.c.b16 %v107, %v106
  %v123 = vpack.c.b16 %v109, %v108
  %v124 = vpack.c.b16 %v111, %v110
  %v125 = vpack.c.b16 %v113, %v112
  %v126 = vpack.c.b16 %v115, %v114
  %v127 = vpack.c.b16 %v117, %v116
  %v128 = vpack.c.b16 %v119, %v118
  %v129 = vpack.c.b16 %v121, %v120
  %138 = vmatpush.bf16.msra.mxu0 %v129
  %139 = vmatpush.bf16.msra.mxu0 %v128
  %140 = vmatpush.bf16.msra.mxu0 %v127
  %141 = vmatpush.bf16.msra.mxu0 %v126
  %142 = vmatpush.bf16.msra.mxu0 %v125
  %143 = vmatpush.bf16.msra.mxu0 %v124
  %144 = vmatpush.bf16.msra.mxu0 %v123
  %145 = vmatpush.bf16.msra.mxu0 %v122
  %146 = vmatmul.bf16.gmra.mxu0 %v69
  %v147 = vpop.f32.mrf.mxu0
  %v148 = vadd.f32 %v88, %v147
  %v149 = vpop.f32.mrf.mxu0
  %150 = vdwg.mxu0
  %v151 = vmax.f32 %v148, 0.0
  %v152 = vld [vmem:[%s5] sm:$0x1]
  %v154 = vperm.slane %v152, 0
  %v156 = vmul.f32 %v151, %v154
  %vm157 = vcmask 261120
  %v158 = vsel %vm157, %v156, 0.0
  %159 = vadd.xlane.f32.xlu0 %v158
  %v160 = vpop.xlane.xlu0 %159
  %v161 = vld [vmem:[#allocation2] sm:$0x1]
  %v163 = vperm.slane %v161, 0
  %v165 = vadd.f32 %v160, %v163
  %v166 = vsub.f32 0.0, %v165
  %v167 = vmul.f32 %v166, 1.442695
  %v168 = vpow.pop %v167
  %v169 = vadd.f32 %v168, 1.0
  %v170 = vrcp.pop %v169
  %v171 = vmul.f32 %v169, %v170
  %v172 = vsub.f32 1.0, %v171
  %v173 = vmul.f32 %v170, %v172
  %v174 = vadd.f32 %v170, %v173
  %vm175 = vweird.f32 %v169
  %vm176 = vweird.f32 %v170
  %vm177 = vmor %vm175, %vm176
  %v178 = vsel %vm177, %v170, %v174
  %v179 = vand.u32 2147483647, %v169
  %vm180 = vcmp.eq.f32.partialorder %v179, 8.507059e+37
  %v181 = vand.u32 %v169, 2147483648
  %v182 = vor.u32 1.1754944e-38, %v181
  %v183 = vsel %vm180, %v182, %v178
  %v184 = vmul.f32 1.0, %v183
  %v185 = vsub.f32 1.0, %v184
  %v186 = vlaneseq
  %v187 = vand.u32 %v186, 127
  %vm188 = vcmp.eq.s32.totalorder %v187, 1
  %190 = vset.pattern.permute.xlu0 0
  %191 = vperm.xlu0 %190, %v184
  %v192 = vpop.permute.xlu0 %191
  %195 = vset.pattern.permute.xlu0 0
  %196 = vperm.xlu0 %195, %v185
  %v197 = vpop.permute.xlu0 %196
  %v199 = vsel %vm188, %v192, %v197
  %vm200 = vcmask 15360
  %201 = vst.msk [vmem:[%s7] sm:$0xff] %vm200, %v199
  // Predicated region
  $region30: #{tpu_custom_call.1} parent=0 // pred_check
    _
  $region31: #{tpu_custom_call.1} parent=0 // pred_check_branch
    %203 = sbr.rel (0) target = $region33
  $region32: #{tpu_custom_call.1} parent=0 // pred_region
    _
  $region33: #{tpu_custom_call.1} parent=0 // pred_fallthru
    _
  // Predicated region
  $region34: #{tpu_custom_call.1} parent=0 // pred_check
    _
  $region35: #{tpu_custom_call.1} parent=0 // pred_check_branch
    %205 = sbr.rel (0) target = $region37
  $region36: #{tpu_custom_call.1} parent=0 // pred_region
    _
  $region37: #{tpu_custom_call.1} parent=0 // pred_fallthru
    _

</llo_original>
